<compile_context>
chip_gen: v6e
topology: v6e:2x2x1
jax: 0.10.0
libtpu: 0.0.40
codegen_flags: <defaults>
</compile_context>

<pallas_src>
import jax
import jax.numpy as jnp
from jax.experimental import pallas as pl
from jax.experimental.pallas import tpu as pltpu


def transprob_kernel(head_ref, c_ref, bias_ref, out_ref):
    # head_ref: (tN, D)    bf16, pipelined per grid step
    # c_ref:    (D, M_pad) bf16, resident (C = A @ dependent.T, padded cols = 0)
    # bias_ref: (1, M_pad) f32,  resident (lin2 for valid cols, -1e30 for pad)
    logits = jnp.dot(head_ref[...], c_ref[...],
                     preferred_element_type=jnp.float32)       # MXU, f32 acc
    x = logits + bias_ref[...]                                  # (tN, M_pad) f32

    # Row-wise numerically stable softmax, all in f32.  Padded columns carry
    # -1e30 via the bias and underflow to exactly 0 after exp.
    m = jnp.max(x, axis=1, keepdims=True)
    e = jnp.exp(x - m)
    s = jnp.sum(e, axis=1, keepdims=True)
    out_ref[...] = (e * pl.reciprocal(s, approx=False)).astype(out_ref.dtype)


def _pick_tile_n(N, D, M_pad, out_bytes=4, budget_bytes=48 * 1024 * 1024):
    """Largest 16-aligned (bf16 sublane packing) N-tile fitting the VMEM budget."""
    resident = D * M_pad * 2 + M_pad * 4          # C (bf16) + bias (f32), 1 copy
    tn = 512
    while tn > 16 and resident + 2 * tn * (M_pad * out_bytes + D * 2) > budget_bytes:
        tn //= 2
    tn = min(tn, ((N + 15) // 16) * 16)           # don't tile past the problem
    return max(tn, 16)


def trans_prob(head, dependent, A, b1, b2, *, out_dtype=jnp.float32):
    """Pallas-TPU equivalent of TransProb.forward.

    alpha = softmax(head @ A @ dependent.T + (head@b1)[:,None] + dependent@b2, dim=1)

    lin1 = head @ b1 is a per-row constant, hence softmax(dim=1)-invariant;
    it is dropped (identical alpha, fewer ops).
    """
    del b1  # algebraically redundant for the softmax output
    head = jnp.asarray(head)
    dependent = jnp.asarray(dependent)
    N, D = head.shape
    M, Dd = dependent.shape
    assert D == Dd

    # Lane-dense output width.
    M_pad = max(128, ((M + 127) // 128) * 128)

    # ---- Grid-invariant precompute (hoisted out of the kernel) ------------
    # C = A @ dependent.T, computed once in f32, cast to bf16 MXU operand.
    C = jnp.dot(A.astype(jnp.float32), dependent.astype(jnp.float32).T)   # (D, M)
    # bias = dependent @ b2 on valid columns, -1e30 on lane padding.
    lin2 = jnp.dot(dependent.astype(jnp.float32), b2.astype(jnp.float32))  # (M,)
    if M_pad != M:
        C = jnp.pad(C, ((0, 0), (0, M_pad - M)))
        lin2 = jnp.pad(lin2, (0, M_pad - M), constant_values=-1e30)
    C = C.astype(jnp.bfloat16)
    bias = lin2.reshape(1, M_pad)

    # ---- Tile-size selection against the VMEM budget ----------------------
    out_bytes = jnp.dtype(out_dtype).itemsize
    tN = _pick_tile_n(N, D, M_pad, out_bytes=out_bytes)
    N_pad = ((N + tN - 1) // tN) * tN

    head_c = head.astype(jnp.bfloat16)
    if N_pad != N:  # only pad when ragged (skip the extra HBM pass otherwise)
        head_c = jnp.pad(head_c, ((0, N_pad - N), (0, 0)))

    vmem_needed = (2 * tN * D * 2            # head tile, double-buffered bf16
                   + 2 * tN * M_pad * out_bytes   # output tile, double-buffered
                   + D * M_pad * 2           # C resident (single copy)
                   + M_pad * 4)              # bias resident (single copy)
    vmem_limit = int(min(64 * 1024 * 1024,
                         max(16 * 1024 * 1024, vmem_needed * 5 // 4 + (2 << 20))))

    out = pl.pallas_call(
        transprob_kernel,
        out_shape=jax.ShapeDtypeStruct((N_pad, M_pad), out_dtype),
        grid=(N_pad // tN,),
        in_specs=[
            pl.BlockSpec((tN, D), lambda i: (i, 0)),            # head (pipelined)
            pl.BlockSpec(memory_space=pltpu.MemorySpace.VMEM),  # C (resident, 1 copy)
            pl.BlockSpec(memory_space=pltpu.MemorySpace.VMEM),  # bias (resident, 1 copy)
        ],
        out_specs=pl.BlockSpec((tN, M_pad), lambda i: (i, 0)),
        compiler_params=pltpu.CompilerParams(
            dimension_semantics=("parallel",),
            vmem_limit_bytes=vmem_limit),
    )(head_c, C, bias)

    if N_pad != N or M_pad != M:
        out = out[:N, :M]
    return out


if __name__ == "__main__":
    input_dim = 32   # D
    N, M = 8, 16     # rows of head / dependent

    key = jax.random.PRNGKey(0)
    k_a, k_b1, k_b2, k_h, k_d = jax.random.split(key, 5)

    # Parameters: torch.rand -> uniform [0, 1)
    A = jax.random.uniform(k_a, (input_dim, input_dim), dtype=jnp.float32)
    b1 = jax.random.uniform(k_b1, (input_dim,), dtype=jnp.float32)
    b2 = jax.random.uniform(k_b2, (input_dim,), dtype=jnp.float32)

    # Example inputs
    head = jax.random.normal(k_h, (N, input_dim), dtype=jnp.float32)
    dependent = jax.random.normal(k_d, (M, input_dim), dtype=jnp.float32)

    alpha = jax.block_until_ready(trans_prob(head, dependent, A, b1, b2))
    assert alpha.shape == (N, M)

    # Full-precision PyTorch-equivalent reference (includes lin1, which is
    # softmax-invariant). Loose tolerance covers the bf16 MXU operands.
    x_ref = head @ A @ dependent.T + (head @ b1)[:, None] + (dependent @ b2)[None, :]
    alpha_f32 = jax.nn.softmax(x_ref, axis=1)
    assert jnp.allclose(alpha, alpha_f32, atol=1.5e-1, rtol=1.5e-1)

    # Matched-precision reference: same reassociated bf16-operand / f32-acc path
    # the kernel uses (head_bf16 @ bf16(A @ dep.T) + lin2, softmax in f32).
    C_ref = jnp.dot(A, dependent.T).astype(jnp.bfloat16)
    x_match = (jnp.dot(head.astype(jnp.bfloat16), C_ref,
                       preferred_element_type=jnp.float32)
               + (dependent @ b2)[None, :])
    alpha_match = jax.nn.softmax(x_match, axis=1)
    assert jnp.allclose(alpha, alpha_match, atol=2e-2, rtol=2e-2)

    # Rows are valid probability distributions (exact reciprocal in kernel).
    assert jnp.allclose(jnp.sum(alpha, axis=1), 1.0, atol=1e-4)

    print("KERNEL_OK")
</pallas_src>

<mosaic_0001>
module attributes {stable_mosaic.version = 11 : i64} {
  func.func @transprob_kernel(%arg0: i32, %arg1: memref<16x32xbf16, #tpu.memory_space<vmem>>, %arg2: memref<32x128xbf16, #tpu.memory_space<vmem>>, %arg3: memref<1x128xf32, #tpu.memory_space<vmem>>, %arg4: memref<16x128xf32, #tpu.memory_space<vmem>>) attributes {dimension_semantics = [#tpu.dimension_semantics<parallel>], iteration_bounds = array<i64: 1>, scalar_prefetch = 0 : i64, scratch_operands = 0 : i64, tpu.core_type = #tpu.core_type<tc>, window_params = [{transform_indices = @transform_0, window_bounds = array<i64: 16, 32>}, {pipeline_mode = #tpu.pipeline_mode<synchronous>, transform_indices = @transform_1, window_bounds = array<i64: 32, 128>}, {pipeline_mode = #tpu.pipeline_mode<synchronous>, transform_indices = @transform_2, window_bounds = array<i64: 1, 128>}, {transform_indices = @transform_3, window_bounds = array<i64: 16, 128>}]} {
    %c0 = arith.constant 0 : index
    %c0_0 = arith.constant 0 : index
    %0 = vector.load %arg1[%c0, %c0_0] : memref<16x32xbf16, #tpu.memory_space<vmem>>, vector<16x32xbf16>
    %c0_1 = arith.constant 0 : index
    %c0_2 = arith.constant 0 : index
    %1 = vector.load %arg2[%c0_1, %c0_2] : memref<32x128xbf16, #tpu.memory_space<vmem>>, vector<32x128xbf16>
    %cst = arith.constant dense<0.000000e+00> : vector<16x128xf32>
    %2 = tpu.matmul %0, %1, %cst {dimension_numbers = #tpu.dot_dimension_numbers<[1], [0], [0], [1], [0, 0, 1, 1], [], []>} : vector<16x32xbf16>, vector<32x128xbf16>, vector<16x128xf32> -> vector<16x128xf32>
    %c0_3 = arith.constant 0 : index
    %c0_4 = arith.constant 0 : index
    %3 = vector.load %arg3[%c0_3, %c0_4] : memref<1x128xf32, #tpu.memory_space<vmem>>, vector<1x128xf32>
    %4 = vector.broadcast %3 : vector<1x128xf32> to vector<16x128xf32>
    %5 = arith.addf %2, %4 : vector<16x128xf32>
    %cst_5 = arith.constant dense<0xFF800000> : vector<16xf32>
    %6 = vector.multi_reduction <maximumf>, %5, %cst_5 [1] : vector<16x128xf32> to vector<16xf32>
    %7 = vector.shape_cast %6 : vector<16xf32> to vector<16x1xf32>
    %8 = vector.broadcast %7 : vector<16x1xf32> to vector<16x128xf32>
    %9 = arith.subf %5, %8 : vector<16x128xf32>
    %10 = math.exp %9 : vector<16x128xf32>
    %cst_6 = arith.constant dense<0.000000e+00> : vector<16xf32>
    %11 = vector.multi_reduction <add>, %10, %cst_6 [1] : vector<16x128xf32> to vector<16xf32>
    %12 = vector.shape_cast %11 : vector<16xf32> to vector<16x1xf32>
    %13 = tpu.reciprocal %12 : vector<16x1xf32> -> vector<16x1xf32>
    %14 = vector.broadcast %13 : vector<16x1xf32> to vector<16x128xf32>
    %15 = arith.mulf %10, %14 : vector<16x128xf32>
    %c0_7 = arith.constant 0 : index
    %c0_8 = arith.constant 0 : index
    %16 = vector.load %arg4[%c0_7, %c0_8] : memref<16x128xf32, #tpu.memory_space<vmem>>, vector<16x128xf32>
    tpu.vector_store %arg4[%c0_7, %c0_8], %15 {strides = array<i32>} : memref<16x128xf32, #tpu.memory_space<vmem>>, vector<16x128xf32>,
    return
  }
  func.func @transform_0(%arg0: i32) -> (i32, i32) {
    %c0_i32 = arith.constant 0 : i32
    %c0_i32_0 = arith.constant 0 : i32
    return %arg0, %c0_i32 : i32, i32
  }
  func.func @transform_1(%arg0: i32) -> (i32, i32) {
    %c0_i32 = arith.constant 0 : i32
    %c0_i32_0 = arith.constant 0 : i32
    %c0_i32_1 = arith.constant 0 : i32
    return %c0_i32, %c0_i32_0 : i32, i32
  }
  func.func @transform_2(%arg0: i32) -> (i32, i32) {
    %c0_i32 = arith.constant 0 : i32
    %c0_i32_0 = arith.constant 0 : i32
    %c0_i32_1 = arith.constant 0 : i32
    return %c0_i32, %c0_i32_0 : i32, i32
  }
  func.func @transform_3(%arg0: i32) -> (i32, i32) {
    %c0_i32 = arith.constant 0 : i32
    %c0_i32_0 = arith.constant 0 : i32
    return %arg0, %c0_i32 : i32, i32
  }
}

</mosaic_0001>

<llo_original>
// kernel: tpu_custom_call.1
$region0: #{tpu_custom_call.1}
  #allocation0 [shape = 'u32[]', space=smem, size = 0x4, offset = 0x4, fixed_abs, tag = 'smem constant byte address 0x4 - core index']
  #allocation1 [shape = 'u32[144,128]{1,0:T(1,128)}', space=vmem, size = 0x12000, scoped, tag = 'internal scratch']
  %s0 = inlined_call_operand.hbm [shape: bf16[16,32], index: 0, kind: input, shape index: {}]
  %s1 = inlined_call_operand.hbm [shape: bf16[32,128], index: 1, kind: input, shape index: {}]
  %s2 = inlined_call_operand.vmem [shape: f32[1,128], index: 2, kind: input, shape index: {}]
  %s3 = inlined_call_operand.hbm [shape: f32[16,128], index: 3, kind: output, shape index: {}]
  %s4 = sld [smem:[#allocation0]]
  $region30: #{tpu_custom_call.1} parent=0
    _
  %s6 = ssub.s32 1, %s4
  %s7 = scalar_select 0, %s6, %s4
  $region1: #{tpu_custom_call.1} parent=0
    #allocation2 [shape = 'u8[4096]{0}', space=vmem, size = 0x1000, scoped, tag = 'input window, operand 0, single buffered']
    #allocation3 [shape = 's32[1]{0}', space=sflag, size = 0x4, scoped, tag = 'scoped memory for tpu_custom_call.1']
    #allocation4 [shape = 's32[1]{0}', space=sflag, size = 0x4, scoped, tag = 'scoped memory for tpu_custom_call.1']
    #allocation5 [shape = 'u8[8192]{0}', space=vmem, size = 0x2000, scoped, tag = 'input window, operand 1, single buffered']
    #allocation6 [shape = 's32[1]{0}', space=sflag, size = 0x4, scoped, tag = 'scoped memory for tpu_custom_call.1']
    #allocation7 [shape = 'u8[8192]{0}', space=vmem, size = 0x2000, scoped, tag = 'output window, operand 0, single buffered']
    %8 = vsyncpa [#allocation3], 0
    %9 = vsyncpa [#allocation6], 0
    %10 = vsyncpa [#allocation4], 0
    // Predicated region
    $region2: #{tpu_custom_call.1} parent=1 // pred_check
      _
    $region3: #{tpu_custom_call.1} parent=1 // pred_check_branch
      %12 = sbr.rel (0) target = $region5
    $region4: #{tpu_custom_call.1} parent=1 // pred_region
      %s14 = ssub.s32 128, 128
      %15 = vsyncadd [#allocation3], %s14
      %s16 = sshll.u32 [#allocation2], 4
      %s17 = int_to_ptr.vmem [resolvable:$true] %s16
      %22 = dma.hbm_to_vmem [thread:$0]  %s0, 128, %s17, [#allocation3], 64, 64, 4
    $region5: #{tpu_custom_call.1} parent=1 // pred_fallthru
      _
    // Predicated region
    $region6: #{tpu_custom_call.1} parent=1 // pred_check
      _
    $region7: #{tpu_custom_call.1} parent=1 // pred_check_branch
      %24 = sbr.rel (0) target = $region9
    $region8: #{tpu_custom_call.1} parent=1 // pred_region
      %s26 = ssub.s32 256, 256
      %27 = vsyncadd [#allocation6], %s26
      %s28 = sshll.u32 [#allocation5], 4
      %s29 = int_to_ptr.vmem [resolvable:$true] %s28
      %34 = dma.hbm_to_vmem [thread:$0]  %s1, 256, %s29, [#allocation6], 64, 64, 4
    $region9: #{tpu_custom_call.1} parent=1 // pred_fallthru
      _
    // Predicated region
    $region10: #{tpu_custom_call.1} parent=1 // pred_check
      _
    $region11: #{tpu_custom_call.1} parent=1 // pred_check_branch
      %36 = sbr.rel (0) target = $region13
    $region12: #{tpu_custom_call.1} parent=1 // pred_region
      _
    $region13: #{tpu_custom_call.1} parent=1 // pred_fallthru
      _
    // Predicated region
    $region14: #{tpu_custom_call.1} parent=1 // pred_check
      _
    $region15: #{tpu_custom_call.1} parent=1 // pred_check_branch
      %38 = sbr.rel (0) target = $region17
    $region16: #{tpu_custom_call.1} parent=1 // pred_region
      %39 = dma.done [#allocation3], 128
    $region17: #{tpu_custom_call.1} parent=1 // pred_fallthru
      _
    // Predicated region
    $region18: #{tpu_custom_call.1} parent=1 // pred_check
      _
    $region19: #{tpu_custom_call.1} parent=1 // pred_check_branch
      %41 = sbr.rel (0) target = $region21
    $region20: #{tpu_custom_call.1} parent=1 // pred_region
      %42 = dma.done [#allocation6], 256
    $region21: #{tpu_custom_call.1} parent=1 // pred_fallthru
      _
    %v44 = vld [vmem:[#allocation2] sm:$0xf]
    %v45 = vld [vmem:[#allocation2 + $0x4] sm:$0xf]
    %v46 = vld [vmem:[#allocation5] sm:$0xf]
    %v47 = vld [vmem:[#allocation5 + $0x4] sm:$0xf]
    %v48 = vld [vmem:[#allocation5 + $0x8] sm:$0xf]
    %v49 = vld [vmem:[#allocation5 + $0xc] sm:$0xf]
    %v50 = vld [vmem:[%s2] sm:$0x1]
    %v52 = vlaneseq
    %v53 = vshrl.u32 %v52, 7
    %v54 = vsub.s32 0, %v53
    %v55 = vrot.slane %v50, %v54
    %v59 = vunpack.c.l.b16 %v44
    %v60 = vunpack.c.l.b16 %v45
    %v61 = vpack.c.b16 %v60, %v59
    %v66 = vunpack.c.l.b16 %v46
    %v67 = vunpack.c.l.b16 %v47
    %v68 = vunpack.c.l.b16 %v48
    %v69 = vunpack.c.l.b16 %v49
    %v70 = vpack.c.b16 %v67, %v66
    %v71 = vpack.c.b16 %v69, %v68
    %vm74 = vcmask 261120
    %v76 = vsel %vm74, %v61, 0
    %78 = vmatprep.subr.bf16.mxu0 0
    %79 = vmatpush1.bf16.msra.mxu0 0
    %80 = vmatprep.subr.bf16.mxu0 0
    %81 = vmatpush1.bf16.msra.mxu0 0
    %82 = vmatprep.subr.bf16.mxu0 0
    %83 = vmatpush1.bf16.msra.mxu0 0
    %84 = vmatprep.subr.bf16.mxu0 0
    %85 = vmatpush1.bf16.msra.mxu0 0
    %86 = vmatprep.subr.bf16.mxu0 0
    %87 = vmatpush1.bf16.msra.mxu0 0
    %88 = vmatprep.subr.bf16.mxu0 0
    %89 = vmatpush1.bf16.msra.mxu0 0
    %90 = vmatprep.subr.bf16.mxu0 0
    %91 = vmatpush1.bf16.msra.mxu0 %v71
    %92 = vmatprep.subr.bf16.mxu0 0
    %93 = vmatpush1.bf16.msra.mxu0 %v70
    %94 = vmatprep.subr.bf16.mxu0 0
    %95 = vmatpush2.bf16.msra.mxu0 0
    %96 = vmatprep.subr.bf16.mxu0 0
    %97 = vmatpush2.bf16.msra.mxu0 0
    %98 = vmatprep.subr.bf16.mxu0 0
    %99 = vmatpush2.bf16.msra.mxu0 0
    %100 = vmatprep.subr.bf16.mxu0 0
    %101 = vmatpush2.bf16.msra.mxu0 0
    %102 = vmatprep.subr.bf16.mxu0 0
    %103 = vmatpush2.bf16.msra.mxu0 0
    %104 = vmatprep.subr.bf16.mxu0 0
    %105 = vmatpush2.bf16.msra.mxu0 0
    %106 = vmatprep.subr.bf16.mxu0 0
    %107 = vmatpush2.bf16.msra.mxu0 0
    %108 = vmatprep.subr.bf16.mxu0 0
    %109 = vmatpush2.bf16.msra.mxu0 0
    %110 = vmatprep.mubr.bf16.mxu0 0
    %111 = vmatmul.mubr.bf16.gmra.mxu0 %v76
    %v112 = vpop.f32.mrf.mxu0
    %v113 = vadd.f32 %v55, %v112
    %v114 = vpop.f32.mrf.mxu0
    %v115 = vpop.f32.mrf.mxu0
    %v116 = vadd.f32 %v55, %v115
    %v117 = vpop.f32.mrf.mxu0
    %118 = vdwg.mxu0
    %119 = vmax.xlane.f32.xlu0 %v113
    %v120 = vpop.xlane.xlu0 %119
    %121 = vmax.xlane.f32.xlu0 %v116
    %v122 = vpop.xlane.xlu0 %121
    %v123 = vsub.f32 %v113, %v120
    %v124 = vsub.f32 %v116, %v122
    %v125 = vmul.f32 %v123, 1.442695
    %v126 = vpow.pop %v125
    %v127 = vmul.f32 %v124, 1.442695
    %v128 = vpow.pop %v127
    %129 = vadd.xlane.f32.xlu0 %v126
    %v130 = vpop.xlane.xlu0 %129
    %131 = vadd.xlane.f32.xlu0 %v128
    %v132 = vpop.xlane.xlu0 %131
    %v133 = vrcp.pop %v130
    %v134 = vrcp.pop %v132
    %v135 = vmul.f32 %v126, %v133
    %v136 = vmul.f32 %v128, %v134
    %137 = vst [vmem:[#allocation7] sm:$0xff] %v135
    %138 = vst [vmem:[#allocation7 + $0x8] sm:$0xff] %v136
    // Predicated region
    $region22: #{tpu_custom_call.1} parent=1 // pred_check
      _
    $region23: #{tpu_custom_call.1} parent=1 // pred_check_branch
      %140 = sbr.rel (0) target = $region25
    $region24: #{tpu_custom_call.1} parent=1 // pred_region
      %s142 = ssub.s32 256, 256
      %143 = vsyncadd [#allocation4], %s142
      %s144 = sshll.u32 [#allocation7], 4
      %s145 = int_to_ptr.vmem [resolvable:$true] %s144
      %150 = dma.vmem_to_hbm [thread:$0]  %s145, 256, %s3, [#allocation4], 128, 128, 8
    $region25: #{tpu_custom_call.1} parent=1 // pred_fallthru
      _
    // Predicated region
    $region26: #{tpu_custom_call.1} parent=1 // pred_check
      _
    $region27: #{tpu_custom_call.1} parent=1 // pred_check_branch
      %152 = sbr.rel (0) target = $region29
    $region28: #{tpu_custom_call.1} parent=1 // pred_region
      %153 = dma.done [#allocation4], 256
    $region29: #{tpu_custom_call.1} parent=1 // pred_fallthru
      _
    %154 = vsyncpa [#allocation3], 1
    %155 = vsyncpa [#allocation6], 1
    %156 = vsyncpa [#allocation4], 1

</llo_original>
